<compile_context>
chip_gen: v7x
topology: tpu7x:2x2x1
jax: 0.10.0
libtpu: 0.0.40
codegen_flags: <defaults>
</compile_context>

<pallas_src>
import functools

import jax
import jax.numpy as jnp
from jax import lax
from jax.experimental import pallas as pl
from jax.experimental.pallas import tpu as pltpu

_LANES = 128
_SUBLANES = 8
_PALLAS_MIN_ELEMENTS = 1 << 16  # below this, kernel-launch overhead dominates


def _round_up(x, m):
    return ((x + m - 1) // m) * m


def _elementwise_loss(d_f32, penalty, l1):
    """Asymmetric loss of a (already float32) difference d = y_hat - y."""
    if l1:
        # relu(d) + relu(-d)*p  ==  where(d>0, d, -d*p)
        return jnp.where(d_f32 > 0, d_f32, -d_f32 * penalty)
    # relu(d)^2 + relu(-d)^2*p  ==  d*d * where(d>0, 1, p)
    return d_f32 * d_f32 * jnp.where(d_f32 > 0, jnp.float32(1.0), jnp.float32(penalty))


def _asym_loss_kernel(yh_ref, y_ref, out_ref, acc_ref, *, penalty, l1,
                      block_rows, last_block_valid_rows):
    p = pl.program_id(0)          # parallel slice
    s = pl.program_id(1)          # inner ("arbitrary") reduction step

    @pl.when(s == 0)
    def _():
        acc_ref[...] = jnp.zeros_like(acc_ref)

    # Cast in-kernel so lower-precision inputs keep HBM traffic narrow.
    d = yh_ref[...].astype(jnp.float32) - y_ref[...].astype(jnp.float32)
    loss = _elementwise_loss(d, penalty, l1)

    def _accumulate(vals):
        # Tile-aligned (block_rows,128)->(block_rows//8,8,128) reshape, reduced
        # over the leading dim with pure vreg adds into a tiny (8,128)
        # accumulator: one acc load + one store per grid step.
        acc_ref[...] += jnp.sum(
            vals.reshape(block_rows // _SUBLANES, _SUBLANES, _LANES), axis=0)

    if last_block_valid_rows is None:
        # Every block is full: no masking anywhere on the hot path.
        _accumulate(loss)
    else:
        # Exactly one logical block (the last one) extends past the array; it
        # is the only one that pays for the row-granularity mask.  The select
        # also squashes any NaN/Inf garbage in the unfetched buffer region.
        is_last = jnp.logical_and(p == pl.num_programs(0) - 1,
                                  s == pl.num_programs(1) - 1)

        @pl.when(jnp.logical_not(is_last))
        def _():
            _accumulate(loss)

        @pl.when(is_last)
        def _():
            row = lax.broadcasted_iota(jnp.int32, loss.shape, 0)
            _accumulate(jnp.where(row < last_block_valid_rows, loss, 0.0))

    @pl.when(s == pl.num_programs(1) - 1)
    def _():
        # One sublane reduce per parallel slice -> (1, 128) partial sums.
        out_ref[0] = jnp.sum(acc_ref[...], axis=0, keepdims=True)


def _tile_config():
    """Per-generation (max_block_rows, vmem_limit_bytes)."""
    kind = ""
    try:
        kind = jax.devices()[0].device_kind.lower()
    except Exception:
        pass
    if "v2" in kind or "v3" in kind:
        return 2048, None                    # small-VMEM parts: stay at defaults
    if "v6" in kind:
        return 8192, 64 * 1024 * 1024        # v6e: 128 MiB physical, amortize steps
    # v5e (raise the 16 MiB scoped default; 128 MiB physical), v7x (stay well
    # under 64 MiB physical), v4/v5p/unknown.
    return 4096, 32 * 1024 * 1024


def asym_weight_loss(y_hat, y, underestimation_penalty=1.0, L1=False, *,
                     max_block_rows=None,
                     pallas_min_elements=_PALLAS_MIN_ELEMENTS):
    """Pallas TPU implementation of AsymWeightLoss.forward -> scalar mean loss."""
    assert underestimation_penalty > 0, "underestimation_penalty should be larger than 0"
    assert y_hat.shape == y.shape
    penalty = float(underestimation_penalty)  # static -> specializes the kernel
    l1 = bool(L1)

    yh = jnp.ravel(y_hat)
    yy = jnp.ravel(y)
    n = int(yh.shape[0])

    def _jnp_sum(a, b):
        d = a.astype(jnp.float32) - b.astype(jnp.float32)
        return jnp.sum(_elementwise_loss(d, penalty, l1))

    # Tiny tensors: fixed pallas_call/grid overhead dominates -> plain XLA.
    if n < max(int(pallas_min_elements), _SUBLANES * _LANES):
        return _jnp_sum(yh, yy) / jnp.float32(n)

    # ---- lane-dense main slab + (tiny) jnp lane tail: no full-array pad ----
    rows = n // _LANES
    n_main = rows * _LANES
    if n_main == n:
        yh2 = yh.reshape(rows, _LANES)       # bitcast: no data movement
        yy2 = yy.reshape(rows, _LANES)
        tail = jnp.float32(0.0)
    else:
        # <128-element ragged tail handled by a fused jnp reduce.
        tail = _jnp_sum(yh[n_main:], yy[n_main:])
        # TODO(synk): the zero-offset slice below may still materialize one
        # copy of the main slab when n % 128 != 0; only manual DMA from a 1-D
        # HBM ref could avoid it, which isn't worth the complexity here.
        yh2 = yh[:n_main].reshape(rows, _LANES)
        yy2 = yy[:n_main].reshape(rows, _LANES)

    # ---- tiling: even block count, blocks a multiple of 8 rows, <= rows ----
    cap, vmem_limit = _tile_config()
    if max_block_rows is not None:
        cap = int(max_block_rows)
    cap = max(_SUBLANES, (cap // _SUBLANES) * _SUBLANES)

    nb = pl.cdiv(rows, cap)
    if nb == 1 and rows % _SUBLANES:
        nb = 2                   # keep block_rows a multiple of 8 w/o exceeding rows
    if nb > 1 and nb % 2:
        nb += 1                  # even #blocks -> clean 2-way split, no redundant block
    block_rows = _round_up(pl.cdiv(rows, nb), _SUBLANES)
    nb = pl.cdiv(rows, block_rows)           # rounding can shrink the block count

    num_par = 2 if (nb >= 2 and nb % 2 == 0) else 1
    num_inner = nb // num_par

    last_valid = rows - (nb - 1) * block_rows
    last_block_valid_rows = None if last_valid == block_rows else int(last_valid)

    kernel = functools.partial(
        _asym_loss_kernel,
        penalty=penalty, l1=l1,
        block_rows=int(block_rows),
        last_block_valid_rows=last_block_valid_rows)

    in_index = lambda p, s: (p * num_inner + s, 0)

    itemsize = jnp.dtype(yh2.dtype).itemsize
    cost = pl.CostEstimate(flops=6 * n_main, transcendentals=0,
                           bytes_accessed=2 * n_main * itemsize + num_par * _LANES * 4)

    cparams = dict(dimension_semantics=("parallel", "arbitrary"))
    if vmem_limit is not None:
        cparams["vmem_limit_bytes"] = int(vmem_limit)

    partials = pl.pallas_call(
        kernel,
        out_shape=jax.ShapeDtypeStruct((num_par, 1, _LANES), jnp.float32),
        grid_spec=pltpu.PrefetchScalarGridSpec(
            num_scalar_prefetch=0,
            grid=(num_par, num_inner),
            in_specs=[
                pl.BlockSpec((block_rows, _LANES), in_index),
                pl.BlockSpec((block_rows, _LANES), in_index),
            ],
            out_specs=pl.BlockSpec((1, 1, _LANES), lambda p, s: (p, 0, 0)),
            scratch_shapes=[pltpu.VMEM((_SUBLANES, _LANES), jnp.float32)],
        ),
        compiler_params=pltpu.CompilerParams(**cparams),
        cost_estimate=cost,
    )(yh2, yy2)

    # Tiny final reduction (num_par * 128 floats) + mean over the TRUE count.
    return (jnp.sum(partials) + tail) / jnp.float32(n)


def _reference(y_hat, y, penalty=1.0, L1=False):
    d = y_hat - y
    over = jnp.maximum(d, 0.0)
    under = jnp.maximum(-d, 0.0)
    loss = (over + under * penalty) if L1 else (over ** 2 + (under ** 2) * penalty)
    return jnp.mean(loss)


if __name__ == "__main__":
    key = jax.random.PRNGKey(0)
    penalty = 2.5
    checks = []

    # 1) Canonical small NCHW shape, forced through the Pallas kernel
    #    (single full block, no masking path).
    k1, k2, k3, k4 = jax.random.split(key, 4)
    shape = (2, 4, 16, 16)
    a = jax.random.normal(k1, shape, dtype=jnp.float32)
    b = jax.random.normal(k2, shape, dtype=jnp.float32)
    for use_l1 in (False, True):
        got = asym_weight_loss(a, b, penalty, L1=use_l1, pallas_min_elements=0)
        checks.append((got, _reference(a, b, penalty, use_l1), 1e-5))

    # 2) Larger case: 2-way parallel split + masked partial last block;
    #    n % 128 == 0 so the (rows,128) reshape is a free bitcast.
    shape_big = (2, 4, 200, 200)           # 320000 elements -> 2500 rows
    ab = jax.random.normal(k3, shape_big, dtype=jnp.float32)
    bb = jax.random.normal(k4, shape_big, dtype=jnp.float32)
    got = asym_weight_loss(ab, bb, penalty, L1=False)
    checks.append((got, _reference(ab, bb, penalty, False), 1e-4))

    # 3) Same data, small max_block_rows override: multi-step inner reduction
    #    (accumulator init/finalize across grid steps) + even block count.
    got = asym_weight_loss(ab, bb, penalty, L1=True, max_block_rows=640)
    checks.append((got, _reference(ab, bb, penalty, True), 1e-4))

    # 4) Ragged element count (n % 128 != 0): jnp lane-tail + sliced main slab.
    k5, k6 = jax.random.split(k3)
    shape_rag = (2, 4, 131, 129)           # 135192 elements
    ar = jax.random.normal(k5, shape_rag, dtype=jnp.float32)
    br = jax.random.normal(k6, shape_rag, dtype=jnp.float32)
    got = asym_weight_loss(ar, br, penalty, L1=False)
    checks.append((got, _reference(ar, br, penalty, False), 1e-4))

    # 5) Tiny-input fallback path (plain jnp, no kernel launch).
    got = asym_weight_loss(a, b, penalty, L1=False)
    checks.append((got, _reference(a, b, penalty, False), 1e-5))

    for got, want, tol in checks:
        got = jax.block_until_ready(got)
        assert jnp.allclose(got, want, rtol=tol, atol=1e-6), (got, want)

    print("KERNEL_OK")
</pallas_src>

<mosaic_0001>
module attributes {stable_mosaic.version = 11 : i64} {
  func.func @_asym_loss_kernel(%arg0: i32, %arg1: i32, %arg2: memref<16x128xf32, #tpu.memory_space<vmem>>, %arg3: memref<16x128xf32, #tpu.memory_space<vmem>>, %arg4: memref<1x1x128xf32, #tpu.memory_space<vmem>>, %arg5: memref<8x128xf32, #tpu.memory_space<vmem>>) attributes {dimension_semantics = [#tpu.dimension_semantics<parallel>, #tpu.dimension_semantics<arbitrary>], iteration_bounds = array<i64: 1, 1>, scalar_prefetch = 0 : i64, scratch_operands = 1 : i64, tpu.core_type = #tpu.core_type<tc>, window_params = [{transform_indices = @transform_0, window_bounds = array<i64: 16, 128>}, {transform_indices = @transform_1, window_bounds = array<i64: 16, 128>}, {transform_indices = @transform_2, window_bounds = array<i64: 1, 1, 128>}]} {
    %c0_i32 = arith.constant 0 : i32
    %0 = arith.cmpi eq, %arg1, %c0_i32 : i32
    %1 = arith.extui %0 : i1 to i32
    %c0_i32_0 = arith.constant 0 : i32
    %2 = arith.cmpi ne, %1, %c0_i32_0 : i32
    scf.if %2 {
      %cst_13 = arith.constant 0.000000e+00 : f32
      %21 = vector.broadcast %cst_13 : f32 to vector<8x128xf32>
      %c0_14 = arith.constant 0 : index
      %c0_15 = arith.constant 0 : index
      %22 = vector.load %arg5[%c0_14, %c0_15] : memref<8x128xf32, #tpu.memory_space<vmem>>, vector<8x128xf32>
      tpu.vector_store %arg5[%c0_14, %c0_15], %21 {strides = array<i32>} : memref<8x128xf32, #tpu.memory_space<vmem>>, vector<8x128xf32>,
    } else {
    }
    %c0 = arith.constant 0 : index
    %c0_1 = arith.constant 0 : index
    %3 = vector.load %arg2[%c0, %c0_1] : memref<16x128xf32, #tpu.memory_space<vmem>>, vector<16x128xf32>
    %c0_2 = arith.constant 0 : index
    %c0_3 = arith.constant 0 : index
    %4 = vector.load %arg3[%c0_2, %c0_3] : memref<16x128xf32, #tpu.memory_space<vmem>>, vector<16x128xf32>
    %5 = arith.subf %3, %4 : vector<16x128xf32>
    %6 = arith.mulf %5, %5 : vector<16x128xf32>
    %cst = arith.constant 0.000000e+00 : f32
    %7 = vector.broadcast %cst : f32 to vector<16x128xf32>
    %8 = arith.cmpf ogt, %5, %7 : vector<16x128xf32>
    %cst_4 = arith.constant 1.000000e+00 : f32
    %cst_5 = arith.constant 2.500000e+00 : f32
    %9 = vector.broadcast %cst_4 : f32 to vector<16x128xf32>
    %10 = vector.broadcast %cst_5 : f32 to vector<16x128xf32>
    %11 = arith.select %8, %9, %10 : vector<16x128xi1>, vector<16x128xf32>
    %12 = arith.mulf %6, %11 : vector<16x128xf32>
    %c0_6 = arith.constant 0 : index
    %c0_7 = arith.constant 0 : index
    %13 = vector.load %arg5[%c0_6, %c0_7] : memref<8x128xf32, #tpu.memory_space<vmem>>, vector<8x128xf32>
    %14 = vector.shape_cast %12 : vector<16x128xf32> to vector<2x8x128xf32>
    %cst_8 = arith.constant dense<0.000000e+00> : vector<8x128xf32>
    %15 = vector.multi_reduction <add>, %14, %cst_8 [0] : vector<2x8x128xf32> to vector<8x128xf32>
    %16 = arith.addf %13, %15 : vector<8x128xf32>
    %c0_9 = arith.constant 0 : index
    %c0_10 = arith.constant 0 : index
    %17 = vector.load %arg5[%c0_9, %c0_10] : memref<8x128xf32, #tpu.memory_space<vmem>>, vector<8x128xf32>
    tpu.vector_store %arg5[%c0_9, %c0_10], %16 {strides = array<i32>} : memref<8x128xf32, #tpu.memory_space<vmem>>, vector<8x128xf32>,
    %c0_i32_11 = arith.constant 0 : i32
    %18 = arith.cmpi eq, %arg1, %c0_i32_11 : i32
    %19 = arith.extui %18 : i1 to i32
    %c0_i32_12 = arith.constant 0 : i32
    %20 = arith.cmpi ne, %19, %c0_i32_12 : i32
    scf.if %20 {
      %c0_13 = arith.constant 0 : index
      %c0_14 = arith.constant 0 : index
      %21 = vector.load %arg5[%c0_13, %c0_14] : memref<8x128xf32, #tpu.memory_space<vmem>>, vector<8x128xf32>
      %cst_15 = arith.constant dense<0.000000e+00> : vector<128xf32>
      %22 = vector.multi_reduction <add>, %21, %cst_15 [0] : vector<8x128xf32> to vector<128xf32>
      %23 = vector.shape_cast %22 : vector<128xf32> to vector<1x128xf32>
      %c0_16 = arith.constant 0 : index
      %c0_17 = arith.constant 0 : index
      %c0_18 = arith.constant 0 : index
      %24 = vector.load %arg4[%c0_16, %c0_17, %c0_18] : memref<1x1x128xf32, #tpu.memory_space<vmem>>, vector<1x1x128xf32>
      %25 = vector.shape_cast %24 : vector<1x1x128xf32> to vector<1x128xf32>
      %26 = vector.shape_cast %23 : vector<1x128xf32> to vector<1x1x128xf32>
      tpu.vector_store %arg4[%c0_16, %c0_17, %c0_18], %26 {strides = array<i32>} : memref<1x1x128xf32, #tpu.memory_space<vmem>>, vector<1x1x128xf32>,
    } else {
    }
    return
  }
  func.func @transform_0(%arg0: i32, %arg1: i32) -> (i32, i32) {
    %c1_i32 = arith.constant 1 : i32
    %0 = arith.muli %arg0, %c1_i32 : i32
    %1 = arith.addi %0, %arg1 : i32
    %c0_i32 = arith.constant 0 : i32
    %c0_i32_0 = arith.constant 0 : i32
    return %1, %c0_i32 : i32, i32
  }
  func.func @transform_1(%arg0: i32, %arg1: i32) -> (i32, i32) {
    %c1_i32 = arith.constant 1 : i32
    %0 = arith.muli %arg0, %c1_i32 : i32
    %1 = arith.addi %0, %arg1 : i32
    %c0_i32 = arith.constant 0 : i32
    %c0_i32_0 = arith.constant 0 : i32
    return %1, %c0_i32 : i32, i32
  }
  func.func @transform_2(%arg0: i32, %arg1: i32) -> (i32, i32, i32) {
    %c0_i32 = arith.constant 0 : i32
    %c0_i32_0 = arith.constant 0 : i32
    %c0_i32_1 = arith.constant 0 : i32
    return %arg0, %c0_i32, %c0_i32_0 : i32, i32, i32
  }
}

</mosaic_0001>

<llo_original>
// kernel: tpu_custom_call.1
$region0: #{tpu_custom_call.1}
  #allocation0 [shape = 'u32[]', space=smem, size = 0x4, offset = 0x4, fixed_abs, tag = 'smem constant byte address 0x4 - core index']
  #allocation1 [shape = 'u32[144,128]{1,0:T(1,128)}', space=vmem, size = 0x12000, scoped, tag = 'internal scratch']
  #allocation2 [shape = 'f32[8,128]{1,0:T(8,128)}', space=vmem, size = 0x1000, scoped, tag = 'scratch operand']
  %s0 = inlined_call_operand.hbm [shape: f32[16,128], index: 0, kind: input, shape index: {}]
  %s1 = inlined_call_operand.hbm [shape: f32[16,128], index: 1, kind: input, shape index: {}]
  %s2 = inlined_call_operand.hbm [shape: f32[1,1,128], index: 2, kind: output, shape index: {}]
  %s3 = sld [smem:[#allocation0]]
  $region34: #{tpu_custom_call.1} parent=0
    _
  %s5 = ssub.s32 1, %s3
  %s6 = scalar_select 0, %s5, %s3
  $region1: #{tpu_custom_call.1} parent=0
    #allocation3 [shape = 'u8[8192]{0}', space=vmem, size = 0x2000, scoped, tag = 'input window, operand 0, single buffered']
    #allocation4 [shape = 's32[1]{0}', space=sflag, size = 0x4, scoped, tag = 'scoped memory for tpu_custom_call.1']
    #allocation5 [shape = 's32[1]{0}', space=sflag, size = 0x4, scoped, tag = 'scoped memory for tpu_custom_call.1']
    #allocation6 [shape = 'u8[8192]{0}', space=vmem, size = 0x2000, scoped, tag = 'input window, operand 1, single buffered']
    #allocation7 [shape = 's32[1]{0}', space=sflag, size = 0x4, scoped, tag = 'scoped memory for tpu_custom_call.1']
    #allocation8 [shape = 'u8[512]{0}', space=vmem, size = 0x400, scoped, tag = 'output window, operand 0, single buffered']
    %7 = vsyncpa [#allocation4], 0
    %8 = vsyncpa [#allocation7], 0
    %9 = vsyncpa [#allocation5], 0
    // Predicated region
    $region2: #{tpu_custom_call.1} parent=1 // pred_check
      _
    $region3: #{tpu_custom_call.1} parent=1 // pred_check_branch
      %11 = sbr.rel (0) target = $region5
    $region4: #{tpu_custom_call.1} parent=1 // pred_region
      %s12 = sadd.s32 0, 0
      %s13 = smul.u32 2, %s12
      %s15 = ssub.s32 256, 256
      %16 = vsyncadd [#allocation4], %s15
      %s17 = smul.addr %s13, 128
      %s18 = scalar_lea.hbm %s0, %s17
      %s19 = sshll.u32 [#allocation3], 4
      %s20 = int_to_ptr.vmem [resolvable:$true] %s19
      %25 = dma.hbm_to_vmem [thread:$0]  %s18, 256, %s20, [#allocation4], 128, 128, 8
    $region5: #{tpu_custom_call.1} parent=1 // pred_fallthru
      _
    // Predicated region
    $region6: #{tpu_custom_call.1} parent=1 // pred_check
      _
    $region7: #{tpu_custom_call.1} parent=1 // pred_check_branch
      %27 = sbr.rel (0) target = $region9
    $region8: #{tpu_custom_call.1} parent=1 // pred_region
      %s28 = sadd.s32 0, 0
      %s29 = smul.u32 2, %s28
      %s31 = ssub.s32 256, 256
      %32 = vsyncadd [#allocation7], %s31
      %s33 = smul.addr %s29, 128
      %s34 = scalar_lea.hbm %s1, %s33
      %s35 = sshll.u32 [#allocation6], 4
      %s36 = int_to_ptr.vmem [resolvable:$true] %s35
      %41 = dma.hbm_to_vmem [thread:$0]  %s34, 256, %s36, [#allocation7], 128, 128, 8
    $region9: #{tpu_custom_call.1} parent=1 // pred_fallthru
      _
    // Predicated region
    $region10: #{tpu_custom_call.1} parent=1 // pred_check
      _
    $region11: #{tpu_custom_call.1} parent=1 // pred_check_branch
      %43 = sbr.rel (0) target = $region13
    $region12: #{tpu_custom_call.1} parent=1 // pred_region
      %44 = dma.done [#allocation4], 256
    $region13: #{tpu_custom_call.1} parent=1 // pred_fallthru
      _
    // Predicated region
    $region14: #{tpu_custom_call.1} parent=1 // pred_check
      _
    $region15: #{tpu_custom_call.1} parent=1 // pred_check_branch
      %46 = sbr.rel (0) target = $region17
    $region16: #{tpu_custom_call.1} parent=1 // pred_region
      %47 = dma.done [#allocation7], 256
    $region17: #{tpu_custom_call.1} parent=1 // pred_fallthru
      _
    %s48 = sadd.s32 0, 0
    %s49 = smul.u32 2, %s48
    %s50 = sadd.s32 0, 0
    %s51 = smul.u32 2, %s50
    %p52 = scmp.eq.s32.totalorder 0, 0
    // Predicated region
    $region18: #{tpu_custom_call.1} parent=1 // pred_check
      %p53 = pneg %p52
    $region19: #{tpu_custom_call.1} parent=1 // pred_check_branch
      %55 = sbr.rel (%p53) target = $region21
    $region20: #{tpu_custom_call.1} parent=1 // pred_region
      %56 = vst [vmem:[#allocation2] sm:$0xff] 0.0
    $region21: #{tpu_custom_call.1} parent=1 // pred_fallthru
      _
    %v57 = vld [vmem:[#allocation3] sm:$0xff]
    %v58 = vld [vmem:[#allocation3 + $0x8] sm:$0xff]
    %v59 = vld [vmem:[#allocation6] sm:$0xff]
    %v60 = vld [vmem:[#allocation6 + $0x8] sm:$0xff]
    %v61 = vsub.f32 %v57, %v59
    %v62 = vsub.f32 %v58, %v60
    %v63 = vmul.f32 %v61, %v61
    %v64 = vmul.f32 %v62, %v62
    %vm65 = vcmp.gt.f32.partialorder %v61, 0.0
    %vm66 = vcmp.gt.f32.partialorder %v62, 0.0
    %v67 = vsel %vm65, 1.0, 2.5
    %v68 = vsel %vm66, 1.0, 2.5
    %v69 = vmul.f32 %v63, %v67
    %v70 = vmul.f32 %v64, %v68
    %v71 = vld [vmem:[#allocation2] sm:$0xff]
    %v72 = vadd.f32 %v69, %v70
    %v73 = vadd.f32 %v71, %v72
    %74 = vst [vmem:[#allocation2] sm:$0xff] %v73
    // Predicated region
    $region22: #{tpu_custom_call.1} parent=1 // pred_check
      %p75 = pneg %p52
    $region23: #{tpu_custom_call.1} parent=1 // pred_check_branch
      %77 = sbr.rel (%p75) target = $region25
    $region24: #{tpu_custom_call.1} parent=1 // pred_region
      %v78 = vld [vmem:[#allocation2] sm:$0xff]
      %v79 = vrot.slane %v78, 4
      %v80 = vadd.f32 %v78, %v79
      %v81 = vrot.slane %v80, 2
      %v82 = vadd.f32 %v80, %v81
      %v83 = vrot.slane %v82, 1
      %v84 = vadd.f32 %v82, %v83
      %85 = vst [vmem:[#allocation8] sm:$0x1] %v84
    $region25: #{tpu_custom_call.1} parent=1 // pred_fallthru
      _
    // Predicated region
    $region26: #{tpu_custom_call.1} parent=1 // pred_check
      _
    $region27: #{tpu_custom_call.1} parent=1 // pred_check_branch
      %87 = sbr.rel (0) target = $region29
    $region28: #{tpu_custom_call.1} parent=1 // pred_region
      %s89 = ssub.s32 16, 16
      %90 = vsyncadd [#allocation5], %s89
      %s92 = sshll.u32 [#allocation8], 4
      %s93 = int_to_ptr.vmem [resolvable:$true] %s92
      %95 = dma.vmem_to_hbm [thread:$0]  %s93, 16, %s2, [#allocation5]
    $region29: #{tpu_custom_call.1} parent=1 // pred_fallthru
      _
    // Predicated region
    $region30: #{tpu_custom_call.1} parent=1 // pred_check
      _
    $region31: #{tpu_custom_call.1} parent=1 // pred_check_branch
      %97 = sbr.rel (0) target = $region33
    $region32: #{tpu_custom_call.1} parent=1 // pred_region
      %98 = dma.done [#allocation5], 16
    $region33: #{tpu_custom_call.1} parent=1 // pred_fallthru
      _
    %99 = vsyncpa [#allocation4], 1
    %100 = vsyncpa [#allocation7], 1
    %101 = vsyncpa [#allocation5], 1

</llo_original>
